<compile_context>
chip_gen: v7x
topology: tpu7x:2x2x1
jax: 0.10.0
libtpu: 0.0.40
codegen_flags: <defaults>
</compile_context>

<pallas_src>
import jax
import jax.numpy as jnp
from jax import lax
from jax.experimental import pallas as pl
from jax.experimental.pallas import tpu as pltpu


# ---------------------------------------------------------------------------
# Kernels
# ---------------------------------------------------------------------------

def _linear_kernel_kred(x_ref, w_ref, b_ref, o_ref, acc_ref):
    """General path: 3-D grid (M, N, K) with f32 VMEM accumulator."""
    # x_ref: (tm, tk), w_ref: (tn, tk) [PyTorch (out, in) layout],
    # b_ref: (1, tn), o_ref: (tm, tn), acc_ref: (tm, tn) f32 scratch.
    k = pl.program_id(2)

    @pl.when(k == 0)
    def _():
        acc_ref[...] = jnp.zeros_like(acc_ref)

    # x @ w.T on the MXU: contract axis 1 of both operands.
    acc_ref[...] += lax.dot_general(
        x_ref[...], w_ref[...],
        dimension_numbers=(((1,), (1,)), ((), ())),
        preferred_element_type=jnp.float32,
    )

    @pl.when(k == pl.num_programs(2) - 1)
    def _():
        o_ref[...] = (acc_ref[...] + b_ref[...].astype(jnp.float32)).astype(o_ref.dtype)


def _linear_kernel_single_k(x_ref, w_ref, b_ref, o_ref):
    """Fast path: whole K reduction fits in one block -> 2-D grid, no scratch."""
    acc = lax.dot_general(
        x_ref[...], w_ref[...],
        dimension_numbers=(((1,), (1,)), ((), ())),
        preferred_element_type=jnp.float32,
    )
    o_ref[...] = (acc + b_ref[...].astype(jnp.float32)).astype(o_ref.dtype)


# ---------------------------------------------------------------------------
# Tiling helpers
# ---------------------------------------------------------------------------

def _pick_tile(dim, preferred, align):
    """Balanced tile for `dim`.

    - dim <= preferred: use the full dim (a block equal to the full array dim
      is always legal, aligned or not).
    - else: split into cdiv(dim, preferred) roughly-equal blocks and round the
      block size up to `align`, minimizing zero-padding (e.g. 300 -> 152x2,
      pad to 304, instead of 256x2 padded to 512).
    """
    if dim <= preferred:
        return dim
    nblocks = pl.cdiv(dim, preferred)
    tile = pl.cdiv(dim, nblocks)
    tile = pl.cdiv(tile, align) * align
    return tile


# ---------------------------------------------------------------------------
# Forward pass
# ---------------------------------------------------------------------------

def mlp_forward(x, weight, bias, *, tm_pref=256, tn_pref=512, tk_pref=1024):
    """Pallas forward for MLP (a single nn.Linear).

    x:      (..., K)
    weight: (N, K)   (PyTorch nn.Linear layout: (out_features, in_features))
    bias:   (N,)
    returns (..., N)
    """
    *batch_dims, K = x.shape
    N, K2 = weight.shape
    assert K == K2, "input_size mismatch"
    assert bias.shape == (N,)

    x2d = x.reshape(-1, K)
    M = x2d.shape[0]

    tm = _pick_tile(M, tm_pref, 8)      # sublane-aligned
    tn = _pick_tile(N, tn_pref, 128)    # lane-aligned (output / bias lanes)
    tk = _pick_tile(K, tk_pref, 128)    # lane-aligned (x / weight lanes)

    Mp = pl.cdiv(M, tm) * tm
    Np = pl.cdiv(N, tn) * tn
    Kp = pl.cdiv(K, tk) * tk

    # Zero-pad only when a dim is not a multiple of its tile (zeros are inert
    # for the K-reduction; padded M/N rows/cols are sliced off afterwards).
    xp = x2d if (Mp == M and Kp == K) else jnp.pad(x2d, ((0, Mp - M), (0, Kp - K)))
    wp = weight if (Np == N and Kp == K) else jnp.pad(weight, ((0, Np - N), (0, Kp - K)))
    bp = bias if Np == N else jnp.pad(bias, (0, Np - N))
    b2d = bp.reshape(1, Np)

    mt, nt, kt = Mp // tm, Np // tn, Kp // tk

    cost = pl.CostEstimate(
        flops=2 * Mp * Np * Kp,
        transcendentals=0,
        bytes_accessed=4 * (Mp * Kp + Np * Kp + Mp * Np + Np),
    )

    if kt == 1:
        # Single K block: no accumulator scratch, 2-D grid.
        grid = (mt, nt)
        kernel = _linear_kernel_single_k
        in_specs = [
            pl.BlockSpec((tm, Kp), lambda i, j: (i, 0)),    # x tile (full K)
            pl.BlockSpec((tn, Kp), lambda i, j: (j, 0)),    # weight tile (N, K)
            pl.BlockSpec((1, tn), lambda i, j: (0, j)),     # bias tile
        ]
        out_specs = pl.BlockSpec((tm, tn), lambda i, j: (i, j))
        scratch_shapes = []
        dim_sem = ("parallel", "parallel")
    else:
        grid = (mt, nt, kt)
        kernel = _linear_kernel_kred
        in_specs = [
            pl.BlockSpec((tm, tk), lambda i, j, k: (i, k)),  # x tile
            pl.BlockSpec((tn, tk), lambda i, j, k: (j, k)),  # weight tile (N, K)
            pl.BlockSpec((1, tn), lambda i, j, k: (0, j)),   # bias (K-invariant)
        ]
        out_specs = pl.BlockSpec((tm, tn), lambda i, j, k: (i, j))
        scratch_shapes = [pltpu.VMEM((tm, tn), jnp.float32)]
        dim_sem = ("parallel", "parallel", "arbitrary")

    out = pl.pallas_call(
        kernel,
        out_shape=jax.ShapeDtypeStruct((Mp, Np), x.dtype),
        grid_spec=pltpu.PrefetchScalarGridSpec(
            num_scalar_prefetch=0,
            grid=grid,
            in_specs=in_specs,
            out_specs=out_specs,
            scratch_shapes=scratch_shapes,
        ),
        compiler_params=pltpu.CompilerParams(
            dimension_semantics=dim_sem,
            vmem_limit_bytes=32 * 1024 * 1024,
        ),
        cost_estimate=cost,
    )(xp, wp, b2d)

    if Mp != M or Np != N:
        out = out[:M, :N]
    return out.reshape(*batch_dims, N)


def _reference(x, weight, bias):
    return jnp.dot(x, weight.T, precision=lax.Precision.HIGHEST) + bias


if __name__ == "__main__":
    key = jax.random.PRNGKey(0)

    # --- Test 1: small shapes consistent with the module (batch=8, in=64, out=128).
    M, K, N = 8, 64, 128
    k1, k2, k3, key = jax.random.split(key, 4)
    bound = 1.0 / (K ** 0.5)
    weight = jax.random.uniform(k2, (N, K), jnp.float32, minval=-bound, maxval=bound)
    bias = jax.random.uniform(k3, (N,), jnp.float32, minval=-bound, maxval=bound)
    x = jax.random.normal(k1, (M, K), jnp.float32)

    out = jax.block_until_ready(mlp_forward(x, weight, bias))
    ref = _reference(x, weight, bias)
    assert out.shape == (M, N)
    assert jnp.allclose(out, ref, atol=1e-4, rtol=1e-4), "mismatch vs reference (small)"

    # --- Test 2: exercises the tiled K-reduction path (multiple M/N/K blocks + padding).
    M2, K2_, N2 = 300, 1408, 640
    k1, k2, k3, key = jax.random.split(key, 4)
    bound2 = 1.0 / (K2_ ** 0.5)
    weight2 = jax.random.uniform(k2, (N2, K2_), jnp.float32, minval=-bound2, maxval=bound2)
    bias2 = jax.random.uniform(k3, (N2,), jnp.float32, minval=-bound2, maxval=bound2)
    x2 = jax.random.normal(k1, (M2, K2_), jnp.float32)

    out2 = jax.block_until_ready(mlp_forward(x2, weight2, bias2))
    ref2 = _reference(x2, weight2, bias2)
    assert out2.shape == (M2, N2)
    assert jnp.allclose(out2, ref2, atol=1e-4, rtol=1e-4), "mismatch vs reference (tiled)"

    # --- Test 3: 3-D input (batch, seq, features), like nn.Linear on a sequence.
    B3, S3, K3, N3 = 2, 8, 32, 48
    k1, k2, k3, key = jax.random.split(key, 4)
    bound3 = 1.0 / (K3 ** 0.5)
    weight3 = jax.random.uniform(k2, (N3, K3), jnp.float32, minval=-bound3, maxval=bound3)
    bias3 = jax.random.uniform(k3, (N3,), jnp.float32, minval=-bound3, maxval=bound3)
    x3 = jax.random.normal(k1, (B3, S3, K3), jnp.float32)

    out3 = jax.block_until_ready(mlp_forward(x3, weight3, bias3))
    ref3 = _reference(x3.reshape(-1, K3), weight3, bias3).reshape(B3, S3, N3)
    assert out3.shape == (B3, S3, N3)
    assert jnp.allclose(out3, ref3, atol=1e-4, rtol=1e-4), "mismatch vs reference (3D)"

    print("KERNEL_OK")
</pallas_src>

<mosaic_0001>
module attributes {stable_mosaic.version = 11 : i64} {
  func.func @_linear_kernel_single_k(%arg0: i32, %arg1: i32, %arg2: memref<8x64xf32, #tpu.memory_space<vmem>>, %arg3: memref<128x64xf32, #tpu.memory_space<vmem>>, %arg4: memref<1x128xf32, #tpu.memory_space<vmem>>, %arg5: memref<8x128xf32, #tpu.memory_space<vmem>>) attributes {dimension_semantics = [#tpu.dimension_semantics<parallel>, #tpu.dimension_semantics<parallel>], iteration_bounds = array<i64: 1, 1>, scalar_prefetch = 0 : i64, scratch_operands = 0 : i64, tpu.core_type = #tpu.core_type<tc>, window_params = [{transform_indices = @transform_0, window_bounds = array<i64: 8, 64>}, {transform_indices = @transform_1, window_bounds = array<i64: 128, 64>}, {transform_indices = @transform_2, window_bounds = array<i64: 1, 128>}, {transform_indices = @transform_3, window_bounds = array<i64: 8, 128>}]} {
    %c0 = arith.constant 0 : index
    %c0_0 = arith.constant 0 : index
    %0 = vector.load %arg2[%c0, %c0_0] : memref<8x64xf32, #tpu.memory_space<vmem>>, vector<8x64xf32>
    %c0_1 = arith.constant 0 : index
    %c0_2 = arith.constant 0 : index
    %1 = vector.load %arg3[%c0_1, %c0_2] : memref<128x64xf32, #tpu.memory_space<vmem>>, vector<128x64xf32>
    %cst = arith.constant dense<0.000000e+00> : vector<8x128xf32>
    %2 = tpu.matmul %0, %1, %cst {dimension_numbers = #tpu.dot_dimension_numbers<[1], [1], [0], [0], [0, 0, 1, 0], [], []>} : vector<8x64xf32>, vector<128x64xf32>, vector<8x128xf32> -> vector<8x128xf32>
    %c0_3 = arith.constant 0 : index
    %c0_4 = arith.constant 0 : index
    %3 = vector.load %arg4[%c0_3, %c0_4] : memref<1x128xf32, #tpu.memory_space<vmem>>, vector<1x128xf32>
    %4 = vector.broadcast %3 : vector<1x128xf32> to vector<8x128xf32>
    %5 = arith.addf %2, %4 : vector<8x128xf32>
    %c0_5 = arith.constant 0 : index
    %c0_6 = arith.constant 0 : index
    %6 = vector.load %arg5[%c0_5, %c0_6] : memref<8x128xf32, #tpu.memory_space<vmem>>, vector<8x128xf32>
    tpu.vector_store %arg5[%c0_5, %c0_6], %5 {strides = array<i32>} : memref<8x128xf32, #tpu.memory_space<vmem>>, vector<8x128xf32>,
    return
  }
  func.func @transform_0(%arg0: i32, %arg1: i32) -> (i32, i32) {
    %c0_i32 = arith.constant 0 : i32
    %c0_i32_0 = arith.constant 0 : i32
    return %arg0, %c0_i32 : i32, i32
  }
  func.func @transform_1(%arg0: i32, %arg1: i32) -> (i32, i32) {
    %c0_i32 = arith.constant 0 : i32
    %c0_i32_0 = arith.constant 0 : i32
    return %arg1, %c0_i32 : i32, i32
  }
  func.func @transform_2(%arg0: i32, %arg1: i32) -> (i32, i32) {
    %c0_i32 = arith.constant 0 : i32
    %c0_i32_0 = arith.constant 0 : i32
    return %c0_i32, %arg1 : i32, i32
  }
  func.func @transform_3(%arg0: i32, %arg1: i32) -> (i32, i32) {
    %c0_i32 = arith.constant 0 : i32
    return %arg0, %arg1 : i32, i32
  }
}

</mosaic_0001>

<llo_original>
// kernel: tpu_custom_call.1
$region0: #{tpu_custom_call.1}
  #allocation0 [shape = 'u32[]', space=smem, size = 0x4, offset = 0x4, fixed_abs, tag = 'smem constant byte address 0x4 - core index']
  #allocation1 [shape = 'u32[144,128]{1,0:T(1,128)}', space=vmem, size = 0x12000, scoped, tag = 'internal scratch']
  %s0 = inlined_call_operand.vmem [shape: f32[8,64], index: 0, kind: input, shape index: {}]
  %s1 = inlined_call_operand.vmem [shape: f32[128,64], index: 1, kind: input, shape index: {}]
  %s2 = inlined_call_operand.vmem [shape: f32[1,128], index: 2, kind: input, shape index: {}]
  %s3 = inlined_call_operand.hbm [shape: f32[8,128], index: 3, kind: output, shape index: {}]
  %s4 = sld [smem:[#allocation0]]
  $region22: #{tpu_custom_call.1} parent=0
    _
  %s6 = ssub.s32 1, %s4
  %s7 = scalar_select 0, %s6, %s4
  $region1: #{tpu_custom_call.1} parent=0
    #allocation2 [shape = 'u8[4096]{0}', space=vmem, size = 0x1000, scoped, tag = 'output window, operand 0, single buffered']
    #allocation3 [shape = 's32[1]{0}', space=sflag, size = 0x4, scoped, tag = 'scoped memory for tpu_custom_call.1']
    %8 = vsyncpa [#allocation3], 0
    // Predicated region
    $region2: #{tpu_custom_call.1} parent=1 // pred_check
      _
    $region3: #{tpu_custom_call.1} parent=1 // pred_check_branch
      %10 = sbr.rel (0) target = $region5
    $region4: #{tpu_custom_call.1} parent=1 // pred_region
      _
    $region5: #{tpu_custom_call.1} parent=1 // pred_fallthru
      _
    // Predicated region
    $region6: #{tpu_custom_call.1} parent=1 // pred_check
      _
    $region7: #{tpu_custom_call.1} parent=1 // pred_check_branch
      %12 = sbr.rel (0) target = $region9
    $region8: #{tpu_custom_call.1} parent=1 // pred_region
      _
    $region9: #{tpu_custom_call.1} parent=1 // pred_fallthru
      _
    // Predicated region
    $region10: #{tpu_custom_call.1} parent=1 // pred_check
      _
    $region11: #{tpu_custom_call.1} parent=1 // pred_check_branch
      %14 = sbr.rel (0) target = $region13
    $region12: #{tpu_custom_call.1} parent=1 // pred_region
      _
    $region13: #{tpu_custom_call.1} parent=1 // pred_fallthru
      _
    %v15 = vld [vmem:[%s0] sm:$0xff]
    %v16 = vld [vmem:[%s1] sm:$0xff]
    %v17 = vld [vmem:[%s1 + $0x8] sm:$0xff]
    %v18 = vld [vmem:[%s1 + $0x10] sm:$0xff]
    %v19 = vld [vmem:[%s1 + $0x18] sm:$0xff]
    %v20 = vld [vmem:[%s1 + $0x20] sm:$0xff]
    %v21 = vld [vmem:[%s1 + $0x28] sm:$0xff]
    %v22 = vld [vmem:[%s1 + $0x30] sm:$0xff]
    %v23 = vld [vmem:[%s1 + $0x38] sm:$0xff]
    %v24 = vld [vmem:[%s1 + $0x40] sm:$0xff]
    %v25 = vld [vmem:[%s1 + $0x48] sm:$0xff]
    %v26 = vld [vmem:[%s1 + $0x50] sm:$0xff]
    %v27 = vld [vmem:[%s1 + $0x58] sm:$0xff]
    %v28 = vld [vmem:[%s1 + $0x60] sm:$0xff]
    %v29 = vld [vmem:[%s1 + $0x68] sm:$0xff]
    %v30 = vld [vmem:[%s1 + $0x70] sm:$0xff]
    %v31 = vld [vmem:[%s1 + $0x78] sm:$0xff]
    %v32 = vld [vmem:[%s2] sm:$0x1]
    %v34 = vlaneseq
    %v35 = vshrl.u32 %v34, 7
    %v36 = vsub.s32 0, %v35
    %v37 = vrot.slane %v32, %v36
    %vm39 = vcmask 523264
    %v41 = vsel %vm39, %v15, 0
    %v44 = vsel %vm39, %v16, 0
    %v47 = vsel %vm39, %v17, 0
    %v50 = vsel %vm39, %v18, 0
    %v53 = vsel %vm39, %v19, 0
    %v56 = vsel %vm39, %v20, 0
    %v59 = vsel %vm39, %v21, 0
    %v62 = vsel %vm39, %v22, 0
    %v65 = vsel %vm39, %v23, 0
    %v68 = vsel %vm39, %v24, 0
    %v71 = vsel %vm39, %v25, 0
    %v74 = vsel %vm39, %v26, 0
    %v77 = vsel %vm39, %v27, 0
    %v80 = vsel %vm39, %v28, 0
    %v83 = vsel %vm39, %v29, 0
    %v86 = vsel %vm39, %v30, 0
    %v89 = vsel %vm39, %v31, 0
    %91 = vmatprep.subr.mxu0 0.0
    %92 = vmatpush1.xpose.msra.mxu0 %v44
    %93 = vmatprep.subr.mxu0 0.0
    %94 = vmatpush1.xpose.msra.mxu0 %v47
    %95 = vmatprep.subr.mxu0 0.0
    %96 = vmatpush1.xpose.msra.mxu0 %v50
    %97 = vmatprep.subr.mxu0 0.0
    %98 = vmatpush1.xpose.msra.mxu0 %v53
    %99 = vmatprep.subr.mxu0 0.0
    %100 = vmatpush1.xpose.msra.mxu0 %v56
    %101 = vmatprep.subr.mxu0 0.0
    %102 = vmatpush1.xpose.msra.mxu0 %v59
    %103 = vmatprep.subr.mxu0 0.0
    %104 = vmatpush1.xpose.msra.mxu0 %v62
    %105 = vmatprep.subr.mxu0 0.0
    %106 = vmatpush1.xpose.msra.mxu0 %v65
    %107 = vmatprep.subr.mxu0 0.0
    %108 = vmatpush1.xpose.msra.mxu0 %v68
    %109 = vmatprep.subr.mxu0 0.0
    %110 = vmatpush1.xpose.msra.mxu0 %v71
    %111 = vmatprep.subr.mxu0 0.0
    %112 = vmatpush1.xpose.msra.mxu0 %v74
    %113 = vmatprep.subr.mxu0 0.0
    %114 = vmatpush1.xpose.msra.mxu0 %v77
    %115 = vmatprep.subr.mxu0 0.0
    %116 = vmatpush1.xpose.msra.mxu0 %v80
    %117 = vmatprep.subr.mxu0 0.0
    %118 = vmatpush1.xpose.msra.mxu0 %v83
    %119 = vmatprep.subr.mxu0 0.0
    %120 = vmatpush1.xpose.msra.mxu0 %v86
    %121 = vmatprep.subr.mxu0 0.0
    %122 = vmatpush1.xpose.msra.mxu0 %v89
    %123 = vmatprep.subr.mxu0 0.0
    %124 = vmatpush1.xpose.msra.mxu0 0.0
    %125 = vmatprep.subr.mxu0 0.0
    %126 = vmatpush1.xpose.msra.mxu0 0.0
    %127 = vmatprep.subr.mxu0 0.0
    %128 = vmatpush1.xpose.msra.mxu0 0.0
    %129 = vmatprep.subr.mxu0 0.0
    %130 = vmatpush1.xpose.msra.mxu0 0.0
    %131 = vmatprep.subr.mxu0 0.0
    %132 = vmatpush1.xpose.msra.mxu0 0.0
    %133 = vmatprep.subr.mxu0 0.0
    %134 = vmatpush1.xpose.msra.mxu0 0.0
    %135 = vmatprep.subr.mxu0 0.0
    %136 = vmatpush1.xpose.msra.mxu0 0.0
    %137 = vmatprep.subr.mxu0 0.0
    %138 = vmatpush1.xpose.msra.mxu0 0.0
    %139 = vmatprep.subr.mxu0 0.0
    %140 = vmatpush1.xpose.msra.mxu0 0.0
    %141 = vmatprep.subr.mxu0 0.0
    %142 = vmatpush1.xpose.msra.mxu0 0.0
    %143 = vmatprep.subr.mxu0 0.0
    %144 = vmatpush1.xpose.msra.mxu0 0.0
    %145 = vmatprep.subr.mxu0 0.0
    %146 = vmatpush1.xpose.msra.mxu0 0.0
    %147 = vmatprep.subr.mxu0 0.0
    %148 = vmatpush1.xpose.msra.mxu0 0.0
    %149 = vmatprep.subr.mxu0 0.0
    %150 = vmatpush1.xpose.msra.mxu0 0.0
    %151 = vmatprep.subr.mxu0 0.0
    %152 = vmatpush1.xpose.msra.mxu0 0.0
    %153 = vmatprep.subr.mxu0 0.0
    %154 = vmatpush1.xpose.msra.mxu0 0.0
    %155 = vmatprep.mubr.f32.mxu0 0.0
    %156 = vmatmul.mubr.f32.gmra.mrb[0].mxu0 %v41
    %v157 = vpop.f32.mrb[0].mxu0
    %v158 = vadd.f32 %v37, %v157
    %v159 = vpop.f32.mrb[0].mxu0
    %160 = vdwg.mxu0
    %161 = vst [vmem:[#allocation2] sm:$0xff] %v158
    // Predicated region
    $region14: #{tpu_custom_call.1} parent=1 // pred_check
      _
    $region15: #{tpu_custom_call.1} parent=1 // pred_check_branch
      %163 = sbr.rel (0) target = $region17
    $region16: #{tpu_custom_call.1} parent=1 // pred_region
      %s165 = ssub.s32 128, 128
      %166 = vsyncadd [#allocation3], %s165
      %s168 = sshll.u32 [#allocation2], 4
      %s169 = int_to_ptr.vmem [resolvable:$true] %s168
      %171 = dma.vmem_to_hbm [thread:$0]  %s169, 128, %s3, [#allocation3]
    $region17: #{tpu_custom_call.1} parent=1 // pred_fallthru
      _
    // Predicated region
    $region18: #{tpu_custom_call.1} parent=1 // pred_check
      _
    $region19: #{tpu_custom_call.1} parent=1 // pred_check_branch
      %173 = sbr.rel (0) target = $region21
    $region20: #{tpu_custom_call.1} parent=1 // pred_region
      %174 = dma.done [#allocation3], 128
    $region21: #{tpu_custom_call.1} parent=1 // pred_fallthru
      _
    %175 = vsyncpa [#allocation3], 1

</llo_original>
